<compile_context>
chip_gen: v7x
topology: tpu7x:2x2x1
jax: 0.10.0
libtpu: 0.0.40
codegen_flags: <defaults>
</compile_context>

<pallas_src>
import random
from functools import partial

import numpy as np
import jax
import jax.numpy as jnp
from jax.experimental import pallas as pl
from jax.experimental.pallas import tpu as pltpu

_LANE = 128
_BLOCK_BUDGET = None


def _block_byte_budget():
    """Per-block byte budget, chosen per TPU generation."""
    global _BLOCK_BUDGET
    if _BLOCK_BUDGET is None:
        try:
            vmem = int(pltpu.get_tpu_info().vmem_capacity_bytes)
        except Exception:  # CPU interpret / unknown chip -> conservative
            vmem = 128 << 20
        # v7x: 64 MiB VMEM, 3.2 TB/s HBM -> ~4 MiB blocks to hide the ~0.35us
        # per-grid-step cost (double-buffered in+out ~16 MiB < 32 MiB default).
        # v5e/v6e: 2 MiB blocks fit v5e's 16 MiB default scoped VMEM with no
        # flag changes and already sit at ~85% of the v6e HBM roofline.
        _BLOCK_BUDGET = (4 << 20) if vmem <= (64 << 20) else (2 << 20)
    return _BLOCK_BUDGET


def _pick_tiles(rows, cols, itemsize, budget):
    """Pick (TM, TN): TN lane-aligned (128) or full-extent, TM sublane-aligned
    or full-extent, byte footprint <= budget, preferring lane-dense tiles."""
    sub = max(8, 32 // itemsize)                      # 8 f32, 16 bf16, 32 int8
    # lane (last-dim) tile, dtype-aware element cap
    tn_pref = max((budget // (256 * itemsize)) // _LANE * _LANE, _LANE)
    tn = cols if cols <= tn_pref else tn_pref
    # sublane tile given tn
    tm_allowed = max(budget // (max(tn, 1) * itemsize), sub)
    tm = rows if rows <= tm_allowed else max((tm_allowed // sub) * sub, sub)
    return tm, tn


def _ensure_multi_block(tm, tn, rows, cols, sub):
    """v7x has 2 TensorCores; a single-block grid leaves one idle.  Split the
    larger axis when the whole tensor would otherwise be one block."""
    if tm >= rows and tn >= cols:
        if cols >= 2 * _LANE:
            tn = max((cols // 2) // _LANE * _LANE, _LANE)
        elif rows >= 2 * sub:
            tm = max((rows // 2) // sub * sub, sub)
    return tm, tn


def _mul_kernel(x_ref, m_ref, o_ref, *, cdt):
    o_ref[...] = (x_ref[...].astype(cdt) * m_ref[...].astype(cdt)).astype(o_ref.dtype)


def _fma_kernel(x_ref, m_ref, a_ref, o_ref, *, cdt):
    o_ref[...] = (x_ref[...].astype(cdt) * m_ref[...].astype(cdt)
                  + a_ref[...].astype(cdt)).astype(o_ref.dtype)


def markov_dropout_pallas(x, mult_c, add_c=None):
    """out[:, c, ...] = x[:, c, ...] * mult_c[c] (+ add_c[c]).

    x: (B, C, *spatial).  mult_c / add_c: host float32 vectors of length C.
    """
    assert x.ndim >= 2
    B, C = int(x.shape[0]), int(x.shape[1])
    N = int(np.prod(x.shape[2:])) if x.ndim > 2 else 1
    itemsize = x.dtype.itemsize
    sub = max(8, 32 // itemsize)
    budget = _block_byte_budget()
    # bf16/f16 math stays in native width (v6e/v7x bf16 VALUs; Mosaic inserts
    # the converts on v5e); everything else computes in f32.
    cdt = x.dtype if (jnp.issubdtype(x.dtype, jnp.floating) and itemsize <= 2) \
        else jnp.float32

    mult_c = np.asarray(mult_c, np.float32).reshape(C)
    fused_add = add_c is not None and bool(np.any(np.asarray(add_c) != 0.0))
    if fused_add:
        add_c = np.asarray(add_c, np.float32).reshape(C)
    kernel = partial(_fma_kernel if fused_add else _mul_kernel, cdt=cdt)

    if N < _LANE:
        # ---- lane-dense path: channels (x spatial) live on lanes -----------
        # (B, C) / small-spatial inputs would otherwise become (B*C, N<128)
        # with 1..127-lane masked stores at ~1/128 lane utilisation.
        W = C * N
        x2 = x.reshape(B, W)
        ops = [x2, jnp.asarray(np.repeat(mult_c, N).reshape(1, W))]
        if fused_add:
            ops.append(jnp.asarray(np.repeat(add_c, N).reshape(1, W)))
        tm, tn = _pick_tiles(B, W, itemsize, budget)
        tm, tn = _ensure_multi_block(tm, tn, B, W, sub)
        grid = (pl.cdiv(B, tm), pl.cdiv(W, tn))
        x_spec = pl.BlockSpec((tm, tn), lambda i, j: (i, j))
        vec_spec = pl.BlockSpec((1, tn), lambda i, j: (0, j))
        in_specs = [x_spec, vec_spec] + ([vec_spec] if fused_add else [])
        out = pl.pallas_call(
            kernel,
            out_shape=jax.ShapeDtypeStruct((B, W), x.dtype),
            grid=grid,
            in_specs=in_specs,
            out_specs=x_spec,
            compiler_params=pltpu.CompilerParams(
                dimension_semantics=("parallel", "parallel")),
        )(*ops)
        return out.reshape(x.shape)

    # ---- 3-D path: (B, C, N) with spatial on lanes --------------------------
    x3 = x.reshape(B, C, N)
    ops = [x3, jnp.asarray(mult_c.reshape(C, 1))]
    if fused_add:
        ops.append(jnp.asarray(add_c.reshape(C, 1)))
    tmc, tn = _pick_tiles(C, N, itemsize, budget)
    if B == 1:
        tmc, tn = _ensure_multi_block(tmc, tn, C, N, sub)
    # N innermost: mult/add block index is constant across it -> re-DMA elided.
    grid = (B, pl.cdiv(C, tmc), pl.cdiv(N, tn))
    x_spec = pl.BlockSpec((None, tmc, tn), lambda b, i, j: (b, i, j))
    vec_spec = pl.BlockSpec((tmc, 1), lambda b, i, j: (i, 0))
    in_specs = [x_spec, vec_spec] + ([vec_spec] if fused_add else [])
    out = pl.pallas_call(
        kernel,
        out_shape=jax.ShapeDtypeStruct((B, C, N), x.dtype),
        grid=grid,
        in_specs=in_specs,
        out_specs=x_spec,
        compiler_params=pltpu.CompilerParams(
            dimension_semantics=("parallel", "parallel", "parallel")),
    )(*ops)
    return out.reshape(x.shape)


class LinearMarkovDropout:
    """JAX/Pallas port of candle.prune.dynamic.LinearMarkovDropout (forward only)."""

    def __init__(self, end_prob=0.0, min_length=0.0, rescale=True,
                 rebias=False, size=None):
        self.end_prob = float(end_prob)
        self.min_length = float(min_length)
        self.rescale = rescale
        self.rebias = rebias
        self.fixed_size = None
        self.training = True
        self._x_cache = None
        self._x_cache_key = None
        if rebias:
            # nn.Parameter(torch.zeros(size)) -> deterministic zero init
            self.add_mask = jnp.zeros((int(size),), dtype=jnp.float32)
        # TODO(synk): tied / tied_generator / tied_root share host-side RNG state
        # across modules; only the untied random.randint path is implemented.

    def fix(self, fixed_size):
        self.fixed_size = fixed_size
        return self

    def _rescale_cache(self, C, min_length):
        key = (C, min_length)
        if self._x_cache is None or self._x_cache_key != key:
            ones = np.ones(min_length, dtype=np.float32)
            step = (1.0 - self.end_prob) / (C - min_length)
            arange = np.arange(1.0, self.end_prob, -step, dtype=np.float32)
            cache = np.concatenate([ones, arange])[:C]
            if cache.shape[0] < C:  # guard float-arange length drift
                pad_val = float(cache[-1]) if cache.size else 1.0
                cache = np.pad(cache, (0, C - cache.shape[0]),
                               constant_values=pad_val)
            self._x_cache = cache
            self._x_cache_key = key
        return self._x_cache

    def _launch(self, x, mult_c, add_c=None):
        # Identity short-circuit: skip the full HBM read+write pass.
        if np.all(mult_c == 1.0) and (add_c is None or not np.any(add_c)):
            return x
        return markov_dropout_pallas(x, mult_c, add_c)

    def __call__(self, x):
        C = x.shape[1]
        min_length = int(self.min_length * C)

        # eval with fixed_size: (x + rebias) masked at fixed_size, no rescale
        if self.fixed_size is not None and (not self.training):
            rebias_val = 0.0
            if self.rebias and self.fixed_size < self.add_mask.shape[0]:
                rebias_val = float(self.add_mask[self.fixed_size])
            keep = (np.arange(C) < int(self.fixed_size)).astype(np.float32)
            add_c = rebias_val * keep if rebias_val != 0.0 else None
            return self._launch(x, keep, add_c)

        if not self.training:
            return x

        # training path: sample truncation index (host-side RNG, as in PyTorch)
        size = int((C - self.min_length) / (1.0 - self.end_prob))
        end_idx = random.randint(min_length, min_length + size)

        rebias_val = 0.0
        if self.rebias and end_idx < self.add_mask.shape[0]:
            rebias_val = float(self.add_mask[end_idx])

        keep = (np.arange(C) < end_idx).astype(np.float32)
        if self.rescale and (end_idx - min_length != 0):
            cache = self._rescale_cache(C, min_length)
            # NaN-safe: only kept channels use the reciprocal; zeros stay zero.
            inv = np.where(cache > 0.0, 1.0 / np.where(cache > 0.0, cache, 1.0), 0.0)
            mult_c = (keep * inv).astype(np.float32)
        else:
            mult_c = keep
        # out = (x + rebias) * keep / rescale = x*mult + rebias*mult
        add_c = rebias_val * mult_c if rebias_val != 0.0 else None
        return self._launch(x, mult_c, add_c)


if __name__ == "__main__":
    key = jax.random.PRNGKey(0)
    k1, k2, k3 = jax.random.split(key, 3)

    # ---- test 1: conv-style (B, C, H, W) training + rescale (3-D grid path) --
    B, C, H, W = 2, 4, 16, 16
    x1 = jax.random.normal(k1, (B, C, H, W), dtype=jnp.float32)
    random.seed(0)
    e1 = random.randint(0, C)          # same draw the module will make
    random.seed(0)
    mod1 = LinearMarkovDropout(end_prob=0.0, min_length=0.0, rescale=True)
    out1 = jax.block_until_ready(mod1(x1))
    x1n = np.asarray(x1)
    ref1 = x1n.copy()
    ref1[:, e1:, ...] = 0.0
    if e1 != 0:
        cache1 = np.arange(1.0, 0.0, -1.0 / C, dtype=np.float32)[:C]
        ref1 = ref1 / cache1.reshape(1, C, 1, 1)
    assert out1.shape == (B, C, H, W)
    np.testing.assert_allclose(np.asarray(out1), ref1, rtol=1e-5, atol=1e-6)

    # ---- test 2: pure Linear (B, C) training + rescale (lane-dense path) -----
    B2, C2 = 8, 32
    x2 = jax.random.normal(k2, (B2, C2), dtype=jnp.float32)
    random.seed(1)
    e2 = random.randint(0, C2)
    random.seed(1)
    mod2 = LinearMarkovDropout(end_prob=0.0, min_length=0.0, rescale=True)
    out2 = jax.block_until_ready(mod2(x2))
    x2n = np.asarray(x2)
    ref2 = x2n.copy()
    ref2[:, e2:] = 0.0
    if e2 != 0:
        cache2 = np.arange(1.0, 0.0, -1.0 / C2, dtype=np.float32)[:C2]
        ref2 = ref2 / cache2.reshape(1, C2)
    assert out2.shape == (B2, C2)
    np.testing.assert_allclose(np.asarray(out2), ref2, rtol=1e-5, atol=1e-6)

    # ---- test 3: eval fixed_size + rebias (FMA kernel, small spatial) --------
    B3, C3, S3 = 2, 32, 8
    x3 = jax.random.normal(k3, (B3, C3, S3), dtype=jnp.float32)
    mod3 = LinearMarkovDropout(end_prob=0.0, min_length=0.0, rescale=True,
                               rebias=True, size=C3)
    mod3.add_mask = jnp.full((C3,), 0.5, dtype=jnp.float32)
    mod3.training = False
    mod3.fix(16)
    out3 = jax.block_until_ready(mod3(x3))
    ref3 = np.asarray(x3) + 0.5
    ref3[:, 16:, :] = 0.0
    assert out3.shape == (B3, C3, S3)
    np.testing.assert_allclose(np.asarray(out3), ref3, rtol=1e-5, atol=1e-6)

    print("KERNEL_OK")
</pallas_src>

<mosaic_0001>
module attributes {stable_mosaic.version = 11 : i64} {
  func.func @_mul_kernel(%arg0: i32, %arg1: i32, %arg2: i32, %arg3: memref<1x4x256xf32, #tpu.memory_space<vmem>>, %arg4: memref<4x1xf32, #tpu.memory_space<vmem>>, %arg5: memref<1x4x256xf32, #tpu.memory_space<vmem>>) attributes {dimension_semantics = [#tpu.dimension_semantics<parallel>, #tpu.dimension_semantics<parallel>, #tpu.dimension_semantics<parallel>], iteration_bounds = array<i64: 2, 1, 1>, scalar_prefetch = 0 : i64, scratch_operands = 0 : i64, tpu.core_type = #tpu.core_type<tc>, window_params = [{transform_indices = @transform_0, window_bounds = array<i64: 1, 4, 256>}, {transform_indices = @transform_1, window_bounds = array<i64: 4, 1>}, {transform_indices = @transform_2, window_bounds = array<i64: 1, 4, 256>}]} {
    %c0 = arith.constant 0 : index
    %c0_0 = arith.constant 0 : index
    %c0_1 = arith.constant 0 : index
    %0 = vector.load %arg3[%c0, %c0_0, %c0_1] : memref<1x4x256xf32, #tpu.memory_space<vmem>>, vector<1x4x256xf32>
    %1 = vector.shape_cast %0 : vector<1x4x256xf32> to vector<4x256xf32>
    %c0_2 = arith.constant 0 : index
    %c0_3 = arith.constant 0 : index
    %2 = vector.load %arg4[%c0_2, %c0_3] : memref<4x1xf32, #tpu.memory_space<vmem>>, vector<4x1xf32>
    %3 = vector.broadcast %2 : vector<4x1xf32> to vector<4x256xf32>
    %4 = arith.mulf %1, %3 : vector<4x256xf32>
    %c0_4 = arith.constant 0 : index
    %c0_5 = arith.constant 0 : index
    %c0_6 = arith.constant 0 : index
    %5 = vector.load %arg5[%c0_4, %c0_5, %c0_6] : memref<1x4x256xf32, #tpu.memory_space<vmem>>, vector<1x4x256xf32>
    %6 = vector.shape_cast %5 : vector<1x4x256xf32> to vector<4x256xf32>
    %7 = vector.shape_cast %4 : vector<4x256xf32> to vector<1x4x256xf32>
    tpu.vector_store %arg5[%c0_4, %c0_5, %c0_6], %7 {strides = array<i32>} : memref<1x4x256xf32, #tpu.memory_space<vmem>>, vector<1x4x256xf32>,
    return
  }
  func.func @transform_0(%arg0: i32, %arg1: i32, %arg2: i32) -> (i32, i32, i32) {
    %c0_i32 = arith.constant 0 : i32
    return %arg0, %arg1, %arg2 : i32, i32, i32
  }
  func.func @transform_1(%arg0: i32, %arg1: i32, %arg2: i32) -> (i32, i32) {
    %c0_i32 = arith.constant 0 : i32
    %c0_i32_0 = arith.constant 0 : i32
    return %arg1, %c0_i32 : i32, i32
  }
  func.func @transform_2(%arg0: i32, %arg1: i32, %arg2: i32) -> (i32, i32, i32) {
    %c0_i32 = arith.constant 0 : i32
    return %arg0, %arg1, %arg2 : i32, i32, i32
  }
}

</mosaic_0001>

<llo_original>
// kernel: tpu_custom_call.1
$region0: #{tpu_custom_call.1}
  #allocation0 [shape = 'u32[]', space=smem, size = 0x4, offset = 0x4, fixed_abs, tag = 'smem constant byte address 0x4 - core index']
  #allocation1 [shape = 'u32[144,128]{1,0:T(1,128)}', space=vmem, size = 0x12000, scoped, tag = 'internal scratch']
  %s0 = inlined_call_operand.hbm [shape: f32[2,4,256], index: 0, kind: input, shape index: {}]
  %s1 = inlined_call_operand.vmem [shape: f32[4,1], index: 1, kind: input, shape index: {}]
  %s2 = inlined_call_operand.hbm [shape: f32[2,4,256], index: 2, kind: output, shape index: {}]
  %s3 = sld [smem:[#allocation0]]
  $region45: #{tpu_custom_call.1} parent=0
    _
  %s5 = ssub.s32 1, %s3
  %s6 = scalar_select 0, %s5, %s3
  $region1: #{tpu_custom_call.1} parent=0
    #allocation2 [shape = 'u8[8192]{0}', space=vmem, size = 0x2000, scoped, tag = 'input window, operand 0']
    #allocation3 [shape = 's32[2]{0}', space=sflag, size = 0x8, scoped, tag = 'scoped memory for tpu_custom_call.1']
    #allocation4 [shape = 's32[2]{0}', space=sflag, size = 0x8, scoped, tag = 'scoped memory for tpu_custom_call.1']
    #allocation5 [shape = 'u8[8192]{0}', space=vmem, size = 0x2000, scoped, tag = 'output window, operand 0']
    %7 = vsyncpa [#allocation3], 0
    %s8 = scalar_lea.sflag [#allocation3], 1
    %9 = vsyncpa %s8, 0
    %10 = vsyncpa [#allocation4], 0
    %s11 = scalar_lea.sflag [#allocation4], 1
    %12 = vsyncpa %s11, 0
    loop: start=0, step=1, limit=4
    $region2: #{tpu_custom_call.1} parent=1 // loop_pre_header
      _
    $region3: #{tpu_custom_call.1} parent=1 // loop_header
      %s14 = sphi 0, %s18
      %p15 = scmp.ge.s32.totalorder %s14, 4
      %s21 = sphi 0, %s40
      %s22 = sphi 0, %s36
      %s23 = sphi 0, %s32
      %s24 = sphi 0, %s21
      %s25 = sphi 0, %s22
      %s26 = sphi 0, %s23
      %s27 = sphi 0, %s24
      %s28 = sphi 0, %s25
      %s29 = sphi 0, %s26
      %s47 = sphi 0, %s49
      %s50 = sphi 0, %s47
      %s51 = sphi 0, %s50
      %s67 = sphi 0, %s51
      %s73 = sphi 0, %s75
      %s76 = sphi 0, %s73
      %s77 = sphi 0, %s76
      %s93 = sphi 0, %s77
      %s103 = sphi 0, %s105
      %s106 = sphi 0, %s103
      %s107 = sphi 0, %s106
      %s123 = sphi 0, %s107
    $region4: #{tpu_custom_call.1} parent=1 // loop_header_branch
      %17 = sbr.rel (%p15) target = $region8
    $region5: #{tpu_custom_call.1} parent=1 // loop_body
      %s19 = ssub.s32 %s14, 1
      %s20 = ssub.s32 %s14, 2
      %s30 = sadd.s32 1, %s23
      %p31 = scmp.ge.s32.totalorder %s30, 1
      %s32 = scalar_select %p31, 0, %s30
      %s33 = sadd.s32 1, %s22
      %s34 = scalar_select %p31, %s33, %s22
      %p35 = scmp.ge.s32.totalorder %s34, 1
      %s36 = scalar_select %p35, 0, %s34
      %s37 = sadd.s32 1, %s21
      %s38 = scalar_select %p35, %s37, %s21
      %p39 = scmp.ge.s32.totalorder %s38, 2
      %s40 = scalar_select %p39, 0, %s38
      %s41 = ssub.s32 %s21, %s40
      %s42 = ssub.s32 %s22, %s36
      %s43 = sor.u32 %s41, %s42
      %s44 = ssub.s32 %s23, %s32
      %s45 = sor.u32 %s43, %s44
      %p46 = scmp.eq.s32.totalorder %s45, 0
      %s48 = sadd.s32 %s47, 1
      %s49 = scalar_select %p46, %s47, %s48
      %p52 = pneg %p46
      %p53 = scmp.eq.s32.totalorder %s14, 1
      %p54 = por %p52, %p53
      %p55 = scmp.ne.s32.totalorder %s47, %s50
      %p56 = scmp.eq.s32.totalorder %s14, 0
      %p57 = por %p55, %p56
      %p58 = scmp.ne.s32.totalorder %s47, %s50
      %p59 = scmp.eq.s32.totalorder %s19, 1
      %p60 = por %p58, %p59
      %p61 = scmp.ne.s32.totalorder %s50, %s51
      %p62 = scmp.eq.s32.totalorder %s19, 0
      %p63 = por %p61, %p62
      %p64 = scmp.ne.s32.totalorder %s50, %s51
      %p65 = scmp.eq.s32.totalorder %s20, 1
      %p66 = por %p64, %p65
      %p68 = scmp.ne.s32.totalorder %s51, %s67
      %p69 = scmp.eq.s32.totalorder %s20, 0
      %p70 = por %p68, %p69
      %s71 = ssub.s32 %s22, %s36
      %p72 = scmp.eq.s32.totalorder %s71, 0
      %s74 = sadd.s32 %s73, 1
      %s75 = scalar_select %p72, %s73, %s74
      %p78 = pneg %p72
      %p79 = scmp.eq.s32.totalorder %s14, 1
      %p80 = por %p78, %p79
      %p81 = scmp.ne.s32.totalorder %s73, %s76
      %p82 = scmp.eq.s32.totalorder %s14, 0
      %p83 = por %p81, %p82
      %p84 = scmp.ne.s32.totalorder %s73, %s76
      %p85 = scmp.eq.s32.totalorder %s19, 1
      %p86 = por %p84, %p85
      %p87 = scmp.ne.s32.totalorder %s76, %s77
      %p88 = scmp.eq.s32.totalorder %s19, 0
      %p89 = por %p87, %p88
      %p90 = scmp.ne.s32.totalorder %s76, %s77
      %p91 = scmp.eq.s32.totalorder %s20, 1
      %p92 = por %p90, %p91
      %p94 = scmp.ne.s32.totalorder %s77, %s93
      %p95 = scmp.eq.s32.totalorder %s20, 0
      %p96 = por %p94, %p95
      %s97 = ssub.s32 %s21, %s40
      %s98 = ssub.s32 %s22, %s36
      %s99 = sor.u32 %s97, %s98
      %s100 = ssub.s32 %s23, %s32
      %s101 = sor.u32 %s99, %s100
      %p102 = scmp.eq.s32.totalorder %s101, 0
      %s104 = sadd.s32 %s103, 1
      %s105 = scalar_select %p102, %s103, %s104
      %p108 = pneg %p102
      %p109 = scmp.eq.s32.totalorder %s14, 1
      %p110 = por %p108, %p109
      %p111 = scmp.ne.s32.totalorder %s103, %s106
      %p112 = scmp.eq.s32.totalorder %s14, 0
      %p113 = por %p111, %p112
      %p114 = scmp.ne.s32.totalorder %s103, %s106
      %p115 = scmp.eq.s32.totalorder %s19, 1
      %p116 = por %p114, %p115
      %p117 = scmp.ne.s32.totalorder %s106, %s107
      %p118 = scmp.eq.s32.totalorder %s19, 0
      %p119 = por %p117, %p118
      %p120 = scmp.ne.s32.totalorder %s106, %s107
      %p121 = scmp.eq.s32.totalorder %s20, 1
      %p122 = por %p120, %p121
      %p124 = scmp.ne.s32.totalorder %s107, %s123
      %p125 = scmp.eq.s32.totalorder %s20, 0
      %p126 = por %p124, %p125
      %p127 = scmp.le.s32.totalorder 1, %s14
      %p128 = scmp.lt.s32.totalorder %s14, 3
      %p129 = pnand %p127, %p128
      %p130 = pneg %p129
      // Predicated region
      $region9: #{tpu_custom_call.1} parent=5 // pred_check
        _
      $region10: #{tpu_custom_call.1} parent=5 // pred_check_branch
        %132 = sbr.rel (%p129) target = $region12
      $region11: #{tpu_custom_call.1} parent=5 // pred_region
        %s133 = ssub.s32 %s14, 1
        // Predicated region
        $region13: #{tpu_custom_call.1} parent=11 // pred_check
          %p134 = pneg %p89
        $region14: #{tpu_custom_call.1} parent=11 // pred_check_branch
          %136 = sbr.rel (%p134) target = $region16
        $region15: #{tpu_custom_call.1} parent=11 // pred_region
          %p137 = scmp.lt.s32.totalorder %s25, 0
          %s138 = scalar_select %p137, %s25, 0
          %s139 = smul.addr %s138, 4
          %s140 = scalar_lea.vmem %s1, %s139
        $region16: #{tpu_custom_call.1} parent=11 // pred_fallthru
          _
      $region12: #{tpu_custom_call.1} parent=5 // pred_fallthru
        _
      %p141 = scmp.lt.s32.totalorder %s14, 2
      // Predicated region
      $region17: #{tpu_custom_call.1} parent=5 // pred_check
        %p142 = pneg %p141
      $region18: #{tpu_custom_call.1} parent=5 // pred_check_branch
        %144 = sbr.rel (%p142) target = $region20
      $region19: #{tpu_custom_call.1} parent=5 // pred_region
        // Predicated region
        $region21: #{tpu_custom_call.1} parent=19 // pred_check
          %p145 = pneg %p57
        $region22: #{tpu_custom_call.1} parent=19 // pred_check_branch
          %147 = sbr.rel (%p145) target = $region24
        $region23: #{tpu_custom_call.1} parent=19 // pred_region
          %s148 = sand.u32 %s47, 1
          %s149 = scalar_lea.sflag [#allocation3], %s148
          %s150 = sand.u32 %s47, 1
          %s151 = smul.addr %s150, 8
          %s152 = scalar_lea.vmem [#allocation2], %s151
          %s153 = smul.u32 2, %s23
          %s155 = ssub.s32 128, 128
          %156 = vsyncadd %s149, %s155
          %s157 = smul.addr %s22, 2
          %s158 = sadd.s32 %s153, %s157
          %s159 = smul.addr %s21, 2
          %s160 = sadd.s32 %s158, %s159
          %s161 = smul.addr %s160, 64
          %s162 = scalar_lea.hbm %s0, %s161
          %s164 = sshll.u32 %s152, 4
          %s165 = int_to_ptr.vmem [resolvable:$true] %s164
          %167 = dma.hbm_to_vmem [thread:$0]  %s162, 128, %s165, %s149
        $region24: #{tpu_custom_call.1} parent=19 // pred_fallthru
          _
      $region20: #{tpu_custom_call.1} parent=5 // pred_fallthru
        _
      %p168 = scmp.le.s32.totalorder 1, %s14
      %p169 = scmp.lt.s32.totalorder %s14, 3
      %p170 = pnand %p168, %p169
      %p171 = pneg %p170
      // Predicated region
      $region25: #{tpu_custom_call.1} parent=5 // pred_check
        _
      $region26: #{tpu_custom_call.1} parent=5 // pred_check_branch
        %173 = sbr.rel (%p170) target = $region28
      $region27: #{tpu_custom_call.1} parent=5 // pred_region
        %s174 = ssub.s32 %s14, 1
        %s175 = sand.u32 %s50, 1
        %s176 = scalar_lea.sflag [#allocation3], %s175
        %s177 = sand.u32 %s50, 1
        %s178 = smul.addr %s177, 8
        %s179 = scalar_lea.vmem [#allocation2], %s178
        // Predicated region
        $region29: #{tpu_custom_call.1} parent=27 // pred_check
          %p180 = pneg %p63
        $region30: #{tpu_custom_call.1} parent=27 // pred_check_branch
          %182 = sbr.rel (%p180) target = $region32
        $region31: #{tpu_custom_call.1} parent=27 // pred_region
          %183 = dma.done %s176, 128
        $region32: #{tpu_custom_call.1} parent=27 // pred_fallthru
          _
        %s184 = sand.u32 %s50, 1
        %s185 = scalar_lea.sflag [#allocation3], %s184
        %s186 = sand.u32 %s50, 1
        %s187 = smul.addr %s186, 8
        %s188 = scalar_lea.vmem [#allocation2], %s187
        %p189 = pneg %p63
        %p190 = pneg %p60
        %p191 = scmp.lt.s32.totalorder %s25, 0
        %s192 = scalar_select %p191, %s25, 0
        %s193 = smul.addr %s192, 4
        %s194 = scalar_lea.vmem %s1, %s193
        %p195 = pneg %p89
        %p196 = pneg %p86
        %p197 = pneg %p119
        %p198 = pneg %p116
        %s199 = sand.u32 %s106, 1
        %s200 = scalar_lea.sflag [#allocation4], %s199
        %s201 = sand.u32 %s106, 1
        %s202 = smul.addr %s201, 8
        %s203 = scalar_lea.vmem [#allocation5], %s202
        %s204 = smul.u32 2, %s26
        %p205 = scmp.lt.s32.totalorder %s25, 0
        %s206 = scalar_select %p205, %s25, 0
        %s207 = smul.addr %s206, 4
        %s208 = scalar_lea.vmem %s1, %s207
        %s209 = smul.u32 2, %s26
        %v210 = vld [vmem:[%s179] sm:$0xff]
        %v211 = vld [vmem:[%s208] sm:$0xf]
        %213 = vset.pattern.permute.xlu0 0
        %214 = vperm.xlu0 %213, %v211
        %v215 = vpop.permute.xlu0 %214
        %v217 = vunpack.c.l.s4 839922192
        %v218 = vunpack.c.0.s8 %v217
        %v219 = vlaneseq
        %v220 = vshrl.u32 %v219, 7
        %v221 = vsub.s32 %v218, %v220
        %v222 = vrot.slane %v215, %v221
        %v224 = vmul.f32 %v210, %v222
        %225 = vst [vmem:[%s203] sm:$0xff] %v224
        %s226 = sand.u32 %s106, 1
        %s227 = scalar_lea.sflag [#allocation4], %s226
        %s228 = sand.u32 %s106, 1
        %s229 = smul.addr %s228, 8
        %s230 = scalar_lea.vmem [#allocation5], %s229
        // Predicated region
        $region33: #{tpu_custom_call.1} parent=27 // pred_check
          %p231 = pneg %p116
        $region34: #{tpu_custom_call.1} parent=27 // pred_check_branch
          %233 = sbr.rel (%p231) target = $region36
        $region35: #{tpu_custom_call.1} parent=27 // pred_region
          %s234 = smul.u32 2, %s26
          %s236 = ssub.s32 128, 128
          %237 = vsyncadd %s227, %s236
          %s238 = smul.addr %s25, 2
          %s239 = sadd.s32 %s234, %s238
          %s240 = smul.addr %s24, 2
          %s241 = sadd.s32 %s239, %s240
          %s242 = smul.addr %s241, 64
          %s243 = scalar_lea.hbm %s2, %s242
          %s245 = sshll.u32 %s230, 4
          %s246 = int_to_ptr.vmem [resolvable:$true] %s245
          %248 = dma.vmem_to_hbm [thread:$0]  %s246, 128, %s243, %s227
        $region36: #{tpu_custom_call.1} parent=27 // pred_fallthru
          _
      $region28: #{tpu_custom_call.1} parent=5 // pred_fallthru
        _
      %p249 = scmp.le.s32.totalorder 2, %s14
      // Predicated region
      $region37: #{tpu_custom_call.1} parent=5 // pred_check
        %p250 = pneg %p249
      $region38: #{tpu_custom_call.1} parent=5 // pred_check_branch
        %252 = sbr.rel (%p250) target = $region40
      $region39: #{tpu_custom_call.1} parent=5 // pred_region
        %s253 = ssub.s32 %s14, 2
        // Predicated region
        $region41: #{tpu_custom_call.1} parent=39 // pred_check
          %p254 = pneg %p122
        $region42: #{tpu_custom_call.1} parent=39 // pred_check_branch
          %256 = sbr.rel (%p254) target = $region44
        $region43: #{tpu_custom_call.1} parent=39 // pred_region
          %s257 = sand.u32 %s107, 1
          %s258 = scalar_lea.sflag [#allocation4], %s257
          %s259 = sand.u32 %s107, 1
          %s260 = smul.addr %s259, 8
          %s261 = scalar_lea.vmem [#allocation5], %s260
          %262 = dma.done %s258, 128
        $region44: #{tpu_custom_call.1} parent=39 // pred_fallthru
          _
      $region40: #{tpu_custom_call.1} parent=5 // pred_fallthru
        _
    $region6: #{tpu_custom_call.1} parent=1 // loop_footer
      %s18 = sadd.s32 1, %s14
    $region7: #{tpu_custom_call.1} parent=1 // loop_footer_branch
      %13 = sbr.rel target = $region3
    $region8: #{tpu_custom_call.1} parent=1 // loop_exit
      _
    %263 = vsyncpa [#allocation3], 1
    %s264 = scalar_lea.sflag [#allocation3], 1
    %265 = vsyncpa %s264, 1
    %266 = vsyncpa [#allocation4], 1
    %s267 = scalar_lea.sflag [#allocation4], 1
    %268 = vsyncpa %s267, 1

</llo_original>
